<compile_context>
chip_gen: v7x
topology: tpu7x:2x2x1
jax: 0.10.0
libtpu: 0.0.40
codegen_flags: <defaults>
</compile_context>

<pallas_src>
import math

import jax
import jax.numpy as jnp
from jax.experimental import pallas as pl
from jax.experimental.pallas import tpu as pltpu


# -----------------------------------------------------------------------------
# Kernels
# -----------------------------------------------------------------------------

def _matmul_bias_kernel(x_ref, w_ref, b_ref, o_ref, acc_ref):
    # x_ref: [TM, TK], w_ref: [TN, TK] (native [out, in] layout),
    # b_ref: [1, TN], o_ref: [TM, TN], acc_ref: f32 [TM, TN]
    k = pl.program_id(2)

    @pl.when(k == 0)
    def _():
        acc_ref[...] = jnp.zeros_like(acc_ref)

    # Contract on K of both operands ("NT" matmul) -> the weight transpose is
    # folded into the MXU issue; nothing is materialized.
    acc_ref[...] += jax.lax.dot_general(
        x_ref[...], w_ref[...],
        dimension_numbers=(((1,), (1,)), ((), ())),
        preferred_element_type=jnp.float32)

    @pl.when(k == pl.num_programs(2) - 1)
    def _():
        o_ref[...] = (acc_ref[...] +
                      b_ref[...].astype(jnp.float32)).astype(o_ref.dtype)


def _matmul_kernel(x_ref, w_ref, o_ref, acc_ref):
    # bias=None specialization: no bias buffer, no add.
    k = pl.program_id(2)

    @pl.when(k == 0)
    def _():
        acc_ref[...] = jnp.zeros_like(acc_ref)

    acc_ref[...] += jax.lax.dot_general(
        x_ref[...], w_ref[...],
        dimension_numbers=(((1,), (1,)), ((), ())),
        preferred_element_type=jnp.float32)

    @pl.when(k == pl.num_programs(2) - 1)
    def _():
        o_ref[...] = acc_ref[...].astype(o_ref.dtype)


# -----------------------------------------------------------------------------
# Wrapper
# -----------------------------------------------------------------------------

def _round_up(x, m):
    return ((x + m - 1) // m) * m


def _tile_and_pad(dim, target):
    """Pick (block_size, padded_extent) for one dimension.

    Small dims use the full dim as the block (Pallas' full-extent escape hatch,
    no padding).  Large dims use the MXU-aligned target tile and are padded up
    to a multiple of it.
    """
    if dim <= target:
        return dim, dim
    return target, _round_up(dim, target)


def linear_pallas(x, weight, bias=None, *, tm=256, tn=256, tk=512):
    """F.linear(x, weight, bias) with a tiled Pallas TPU matmul kernel.

    x:      [..., in_channels]
    weight: [out_channels, in_channels]   (PyTorch convention, used as-is)
    bias:   [out_channels] or None
    returns [..., out_channels]
    """
    in_channels = x.shape[-1]
    out_channels = weight.shape[0]
    lead_shape = x.shape[:-1]

    x2d = x.reshape(-1, in_channels)            # [M, K]
    M, K = x2d.shape
    N = out_channels

    TM, Mp = _tile_and_pad(M, tm)
    TN, Np = _tile_and_pad(N, tn)
    TK, Kp = _tile_and_pad(K, tk)

    if Mp != M or Kp != K:
        x2d = jnp.pad(x2d, ((0, Mp - M), (0, Kp - K)))
    w = weight                                  # [N, K], no transpose
    if Np != N or Kp != K:
        w = jnp.pad(w, ((0, Np - N), (0, Kp - K)))

    has_bias = bias is not None
    inputs = [x2d, w]
    in_specs = [
        pl.BlockSpec((TM, TK), lambda i, j, k: (i, k)),   # activations
        pl.BlockSpec((TN, TK), lambda i, j, k: (j, k)),   # weight [N, K]
    ]
    if has_bias:
        b2d = bias.reshape(1, N).astype(x.dtype)
        if Np != N:
            b2d = jnp.pad(b2d, ((0, 0), (0, Np - N)))
        inputs.append(b2d)
        in_specs.append(pl.BlockSpec((1, TN), lambda i, j, k: (0, j)))
        kernel = _matmul_bias_kernel
    else:
        kernel = _matmul_kernel

    grid = (Mp // TM, Np // TN, Kp // TK)

    # Per-step VMEM estimate: double-buffered input/output blocks + f32 acc.
    itemsize = jnp.dtype(x.dtype).itemsize
    est = (2 * (TM * TK + TN * TK + TM * TN) + 2 * TN) * itemsize + TM * TN * 4
    vmem_limit = int(min(max(2 * est, 16 * 1024 * 1024), 64 * 1024 * 1024))

    out = pl.pallas_call(
        kernel,
        out_shape=jax.ShapeDtypeStruct((Mp, Np), x.dtype),
        grid_spec=pltpu.PrefetchScalarGridSpec(
            num_scalar_prefetch=0,
            grid=grid,
            in_specs=in_specs,
            out_specs=pl.BlockSpec((TM, TN), lambda i, j, k: (i, j)),
            scratch_shapes=[pltpu.VMEM((TM, TN), jnp.float32)],
        ),
        compiler_params=pltpu.CompilerParams(
            dimension_semantics=("parallel", "parallel", "arbitrary"),
            vmem_limit_bytes=vmem_limit,
        ),
    )(*inputs)

    if Mp != M or Np != N:
        out = out[:M, :N]
    return out.reshape(*lead_shape, N)


# -----------------------------------------------------------------------------
# Parameter init matching the module's defaults
# -----------------------------------------------------------------------------

def init_linear_params(key, in_channels, out_channels, dtype=jnp.float32):
    """weight ~ kaiming_uniform(fan=in_channels, a=sqrt(5)) -> U(-1/sqrt(fan), 1/sqrt(fan))
    bias   ~ inits.uniform(in_channels, bias)              -> U(-1/sqrt(in), 1/sqrt(in))
    """
    kw, kb = jax.random.split(key)
    bound = 1.0 / math.sqrt(in_channels)
    weight = jax.random.uniform(
        kw, (out_channels, in_channels), dtype=dtype, minval=-bound, maxval=bound)
    bias = jax.random.uniform(
        kb, (out_channels,), dtype=dtype, minval=-bound, maxval=bound)
    return weight, bias


if __name__ == "__main__":
    key = jax.random.PRNGKey(0)
    k_x, k_p, k_x2, k_p2 = jax.random.split(key, 4)

    # --- small test matching the module's forward (single-tile path) ---------
    batch, seq, in_channels, out_channels = 2, 8, 32, 64
    x = jax.random.normal(k_x, (batch, seq, in_channels), dtype=jnp.float32)
    weight, bias = init_linear_params(k_p, in_channels, out_channels)

    y = linear_pallas(x, weight, bias)
    y = jax.block_until_ready(y)

    y_ref = x @ weight.T + bias
    assert y.shape == (batch, seq, out_channels)
    assert jnp.allclose(y, y_ref, atol=1e-5, rtol=1e-5)

    # --- multi-tile + padding path, bias=None specialization ------------------
    b2, s2, c_in2, c_out2 = 4, 96, 160, 192        # M=384 -> two 256-row tiles
    x2 = jax.random.normal(k_x2, (b2, s2, c_in2), dtype=jnp.float32)
    w2, _ = init_linear_params(k_p2, c_in2, c_out2)

    y2 = linear_pallas(x2, w2, None)
    y2 = jax.block_until_ready(y2)

    y2_ref = x2 @ w2.T
    assert y2.shape == (b2, s2, c_out2)
    assert jnp.allclose(y2, y2_ref, atol=1e-3, rtol=1e-3)

    print("KERNEL_OK")
</pallas_src>

<mosaic_0001>
module attributes {stable_mosaic.version = 11 : i64} {
  func.func @_matmul_bias_kernel(%arg0: i32, %arg1: i32, %arg2: i32, %arg3: memref<16x32xf32, #tpu.memory_space<vmem>>, %arg4: memref<64x32xf32, #tpu.memory_space<vmem>>, %arg5: memref<1x64xf32, #tpu.memory_space<vmem>>, %arg6: memref<16x64xf32, #tpu.memory_space<vmem>>, %arg7: memref<16x64xf32, #tpu.memory_space<vmem>>) attributes {dimension_semantics = [#tpu.dimension_semantics<parallel>, #tpu.dimension_semantics<parallel>, #tpu.dimension_semantics<arbitrary>], iteration_bounds = array<i64: 1, 1, 1>, scalar_prefetch = 0 : i64, scratch_operands = 1 : i64, tpu.core_type = #tpu.core_type<tc>, window_params = [{transform_indices = @transform_0, window_bounds = array<i64: 16, 32>}, {transform_indices = @transform_1, window_bounds = array<i64: 64, 32>}, {transform_indices = @transform_2, window_bounds = array<i64: 1, 64>}, {transform_indices = @transform_3, window_bounds = array<i64: 16, 64>}]} {
    %c0_i32 = arith.constant 0 : i32
    %0 = arith.cmpi eq, %arg2, %c0_i32 : i32
    %1 = arith.extui %0 : i1 to i32
    %c0_i32_0 = arith.constant 0 : i32
    %2 = arith.cmpi ne, %1, %c0_i32_0 : i32
    scf.if %2 {
      %cst_10 = arith.constant 0.000000e+00 : f32
      %12 = vector.broadcast %cst_10 : f32 to vector<16x64xf32>
      %c0_11 = arith.constant 0 : index
      %c0_12 = arith.constant 0 : index
      %13 = vector.load %arg7[%c0_11, %c0_12] : memref<16x64xf32, #tpu.memory_space<vmem>>, vector<16x64xf32>
      tpu.vector_store %arg7[%c0_11, %c0_12], %12 {strides = array<i32>} : memref<16x64xf32, #tpu.memory_space<vmem>>, vector<16x64xf32>,
    } else {
    }
    %c0 = arith.constant 0 : index
    %c0_1 = arith.constant 0 : index
    %3 = vector.load %arg7[%c0, %c0_1] : memref<16x64xf32, #tpu.memory_space<vmem>>, vector<16x64xf32>
    %c0_2 = arith.constant 0 : index
    %c0_3 = arith.constant 0 : index
    %4 = vector.load %arg3[%c0_2, %c0_3] : memref<16x32xf32, #tpu.memory_space<vmem>>, vector<16x32xf32>
    %c0_4 = arith.constant 0 : index
    %c0_5 = arith.constant 0 : index
    %5 = vector.load %arg4[%c0_4, %c0_5] : memref<64x32xf32, #tpu.memory_space<vmem>>, vector<64x32xf32>
    %cst = arith.constant dense<0.000000e+00> : vector<16x64xf32>
    %6 = tpu.matmul %4, %5, %cst {dimension_numbers = #tpu.dot_dimension_numbers<[1], [1], [0], [0], [0, 0, 1, 0], [], []>} : vector<16x32xf32>, vector<64x32xf32>, vector<16x64xf32> -> vector<16x64xf32>
    %7 = arith.addf %3, %6 : vector<16x64xf32>
    %c0_6 = arith.constant 0 : index
    %c0_7 = arith.constant 0 : index
    %8 = vector.load %arg7[%c0_6, %c0_7] : memref<16x64xf32, #tpu.memory_space<vmem>>, vector<16x64xf32>
    tpu.vector_store %arg7[%c0_6, %c0_7], %7 {strides = array<i32>} : memref<16x64xf32, #tpu.memory_space<vmem>>, vector<16x64xf32>,
    %c0_i32_8 = arith.constant 0 : i32
    %9 = arith.cmpi eq, %arg2, %c0_i32_8 : i32
    %10 = arith.extui %9 : i1 to i32
    %c0_i32_9 = arith.constant 0 : i32
    %11 = arith.cmpi ne, %10, %c0_i32_9 : i32
    scf.if %11 {
      %c0_10 = arith.constant 0 : index
      %c0_11 = arith.constant 0 : index
      %12 = vector.load %arg7[%c0_10, %c0_11] : memref<16x64xf32, #tpu.memory_space<vmem>>, vector<16x64xf32>
      %c0_12 = arith.constant 0 : index
      %c0_13 = arith.constant 0 : index
      %13 = vector.load %arg5[%c0_12, %c0_13] : memref<1x64xf32, #tpu.memory_space<vmem>>, vector<1x64xf32>
      %14 = vector.broadcast %13 : vector<1x64xf32> to vector<16x64xf32>
      %15 = arith.addf %12, %14 : vector<16x64xf32>
      %c0_14 = arith.constant 0 : index
      %c0_15 = arith.constant 0 : index
      %16 = vector.load %arg6[%c0_14, %c0_15] : memref<16x64xf32, #tpu.memory_space<vmem>>, vector<16x64xf32>
      tpu.vector_store %arg6[%c0_14, %c0_15], %15 {strides = array<i32>} : memref<16x64xf32, #tpu.memory_space<vmem>>, vector<16x64xf32>,
    } else {
    }
    return
  }
  func.func @transform_0(%arg0: i32, %arg1: i32, %arg2: i32) -> (i32, i32) {
    %c0_i32 = arith.constant 0 : i32
    return %arg0, %arg2 : i32, i32
  }
  func.func @transform_1(%arg0: i32, %arg1: i32, %arg2: i32) -> (i32, i32) {
    %c0_i32 = arith.constant 0 : i32
    return %arg1, %arg2 : i32, i32
  }
  func.func @transform_2(%arg0: i32, %arg1: i32, %arg2: i32) -> (i32, i32) {
    %c0_i32 = arith.constant 0 : i32
    %c0_i32_0 = arith.constant 0 : i32
    return %c0_i32, %arg1 : i32, i32
  }
  func.func @transform_3(%arg0: i32, %arg1: i32, %arg2: i32) -> (i32, i32) {
    %c0_i32 = arith.constant 0 : i32
    return %arg0, %arg1 : i32, i32
  }
}

</mosaic_0001>

<llo_original>
// kernel: tpu_custom_call.1
$region0: #{tpu_custom_call.1}
  #allocation0 [shape = 'u32[]', space=smem, size = 0x4, offset = 0x4, fixed_abs, tag = 'smem constant byte address 0x4 - core index']
  #allocation1 [shape = 'u32[144,128]{1,0:T(1,128)}', space=vmem, size = 0x12000, scoped, tag = 'internal scratch']
  #allocation2 [shape = 'f32[16,64]{1,0:T(8,128)}', space=vmem, size = 0x2000, scoped, tag = 'scratch operand']
  %s0 = inlined_call_operand.vmem [shape: f32[16,32], index: 0, kind: input, shape index: {}]
  %s1 = inlined_call_operand.vmem [shape: f32[64,32], index: 1, kind: input, shape index: {}]
  %s2 = inlined_call_operand.vmem [shape: f32[1,64], index: 2, kind: input, shape index: {}]
  %s3 = inlined_call_operand.hbm [shape: f32[16,64], index: 3, kind: output, shape index: {}]
  %s4 = sld [smem:[#allocation0]]
  $region30: #{tpu_custom_call.1} parent=0
    _
  %s6 = ssub.s32 1, %s4
  %s7 = scalar_select 0, %s6, %s4
  $region1: #{tpu_custom_call.1} parent=0
    #allocation3 [shape = 'u8[8192]{0}', space=vmem, size = 0x2000, scoped, tag = 'output window, operand 0, single buffered']
    #allocation4 [shape = 's32[1]{0}', space=sflag, size = 0x4, scoped, tag = 'scoped memory for tpu_custom_call.1']
    %8 = vsyncpa [#allocation4], 0
    // Predicated region
    $region2: #{tpu_custom_call.1} parent=1 // pred_check
      _
    $region3: #{tpu_custom_call.1} parent=1 // pred_check_branch
      %10 = sbr.rel (0) target = $region5
    $region4: #{tpu_custom_call.1} parent=1 // pred_region
      _
    $region5: #{tpu_custom_call.1} parent=1 // pred_fallthru
      _
    // Predicated region
    $region6: #{tpu_custom_call.1} parent=1 // pred_check
      _
    $region7: #{tpu_custom_call.1} parent=1 // pred_check_branch
      %12 = sbr.rel (0) target = $region9
    $region8: #{tpu_custom_call.1} parent=1 // pred_region
      _
    $region9: #{tpu_custom_call.1} parent=1 // pred_fallthru
      _
    // Predicated region
    $region10: #{tpu_custom_call.1} parent=1 // pred_check
      _
    $region11: #{tpu_custom_call.1} parent=1 // pred_check_branch
      %14 = sbr.rel (0) target = $region13
    $region12: #{tpu_custom_call.1} parent=1 // pred_region
      _
    $region13: #{tpu_custom_call.1} parent=1 // pred_fallthru
      _
    %p15 = scmp.eq.s32.totalorder 0, 0
    // Predicated region
    $region14: #{tpu_custom_call.1} parent=1 // pred_check
      %p16 = pneg %p15
    $region15: #{tpu_custom_call.1} parent=1 // pred_check_branch
      %18 = sbr.rel (%p16) target = $region17
    $region16: #{tpu_custom_call.1} parent=1 // pred_region
      %vm19 = vcmask 523264
      %20 = vst.msk [vmem:[#allocation2] sm:$0xff] %vm19, 0.0
      %21 = vst.msk [vmem:[#allocation2 + $0x8] sm:$0xff] %vm19, 0.0
    $region17: #{tpu_custom_call.1} parent=1 // pred_fallthru
      _
    %v22 = vld [vmem:[#allocation2] sm:$0xff]
    %v23 = vld [vmem:[#allocation2 + $0x8] sm:$0xff]
    %v24 = vld [vmem:[%s0] sm:$0xff]
    %v25 = vld [vmem:[%s0 + $0x8] sm:$0xff]
    %v26 = vld [vmem:[%s1] sm:$0xff]
    %v27 = vld [vmem:[%s1 + $0x8] sm:$0xff]
    %v28 = vld [vmem:[%s1 + $0x10] sm:$0xff]
    %v29 = vld [vmem:[%s1 + $0x18] sm:$0xff]
    %v30 = vld [vmem:[%s1 + $0x20] sm:$0xff]
    %v31 = vld [vmem:[%s1 + $0x28] sm:$0xff]
    %v32 = vld [vmem:[%s1 + $0x30] sm:$0xff]
    %v33 = vld [vmem:[%s1 + $0x38] sm:$0xff]
    %vm34 = vcmask 261120
    %v36 = vsel %vm34, %v24, 0
    %v39 = vsel %vm34, %v25, 0
    %v42 = vsel %vm34, %v26, 0
    %v45 = vsel %vm34, %v27, 0
    %v48 = vsel %vm34, %v28, 0
    %v51 = vsel %vm34, %v29, 0
    %v54 = vsel %vm34, %v30, 0
    %v57 = vsel %vm34, %v31, 0
    %v60 = vsel %vm34, %v32, 0
    %v63 = vsel %vm34, %v33, 0
    %65 = vmatprep.subr.mxu0 0.0
    %66 = vmatpush1.xpose.msra.mxu0 %v42
    %67 = vmatprep.subr.mxu0 0.0
    %68 = vmatpush1.xpose.msra.mxu0 %v45
    %69 = vmatprep.subr.mxu0 0.0
    %70 = vmatpush1.xpose.msra.mxu0 %v48
    %71 = vmatprep.subr.mxu0 0.0
    %72 = vmatpush1.xpose.msra.mxu0 %v51
    %73 = vmatprep.subr.mxu0 0.0
    %74 = vmatpush1.xpose.msra.mxu0 %v54
    %75 = vmatprep.subr.mxu0 0.0
    %76 = vmatpush1.xpose.msra.mxu0 %v57
    %77 = vmatprep.subr.mxu0 0.0
    %78 = vmatpush1.xpose.msra.mxu0 %v60
    %79 = vmatprep.subr.mxu0 0.0
    %80 = vmatpush1.xpose.msra.mxu0 %v63
    %81 = vmatprep.subr.mxu0 0.0
    %82 = vmatpush1.xpose.msra.mxu0 0.0
    %83 = vmatprep.subr.mxu0 0.0
    %84 = vmatpush1.xpose.msra.mxu0 0.0
    %85 = vmatprep.subr.mxu0 0.0
    %86 = vmatpush1.xpose.msra.mxu0 0.0
    %87 = vmatprep.subr.mxu0 0.0
    %88 = vmatpush1.xpose.msra.mxu0 0.0
    %89 = vmatprep.subr.mxu0 0.0
    %90 = vmatpush1.xpose.msra.mxu0 0.0
    %91 = vmatprep.subr.mxu0 0.0
    %92 = vmatpush1.xpose.msra.mxu0 0.0
    %93 = vmatprep.subr.mxu0 0.0
    %94 = vmatpush1.xpose.msra.mxu0 0.0
    %95 = vmatprep.subr.mxu0 0.0
    %96 = vmatpush1.xpose.msra.mxu0 0.0
    %97 = vmatprep.subr.mxu0 0.0
    %98 = vmatpush1.xpose.msra.mxu0 0.0
    %99 = vmatprep.subr.mxu0 0.0
    %100 = vmatpush1.xpose.msra.mxu0 0.0
    %101 = vmatprep.subr.mxu0 0.0
    %102 = vmatpush1.xpose.msra.mxu0 0.0
    %103 = vmatprep.subr.mxu0 0.0
    %104 = vmatpush1.xpose.msra.mxu0 0.0
    %105 = vmatprep.subr.mxu0 0.0
    %106 = vmatpush1.xpose.msra.mxu0 0.0
    %107 = vmatprep.subr.mxu0 0.0
    %108 = vmatpush1.xpose.msra.mxu0 0.0
    %109 = vmatprep.subr.mxu0 0.0
    %110 = vmatpush1.xpose.msra.mxu0 0.0
    %111 = vmatprep.subr.mxu0 0.0
    %112 = vmatpush1.xpose.msra.mxu0 0.0
    %113 = vmatprep.subr.mxu0 0.0
    %114 = vmatpush1.xpose.msra.mxu0 0.0
    %115 = vmatprep.subr.mxu0 0.0
    %116 = vmatpush1.xpose.msra.mxu0 0.0
    %117 = vmatprep.subr.mxu0 0.0
    %118 = vmatpush1.xpose.msra.mxu0 0.0
    %119 = vmatprep.subr.mxu0 0.0
    %120 = vmatpush1.xpose.msra.mxu0 0.0
    %121 = vmatprep.subr.mxu0 0.0
    %122 = vmatpush1.xpose.msra.mxu0 0.0
    %123 = vmatprep.subr.mxu0 0.0
    %124 = vmatpush1.xpose.msra.mxu0 0.0
    %125 = vmatprep.subr.mxu0 0.0
    %126 = vmatpush1.xpose.msra.mxu0 0.0
    %127 = vmatprep.subr.mxu0 0.0
    %128 = vmatpush1.xpose.msra.mxu0 0.0
    %129 = vmatprep.mubr.f32.mxu0 0.0
    %130 = vmatmul.mubr.f32.gmra.mrb[0].mxu0 %v36
    %v131 = vpop.f32.mrb[0].mxu0
    %v132 = vadd.f32 0.0, %v131
    %v133 = vpop.f32.mrb[0].mxu0
    %134 = vmatprep.mubr.f32.mxu0 0.0
    %135 = vmatmul.mubr.f32.gmra.mrb[0].mxu0 %v39
    %v136 = vpop.f32.mrb[0].mxu0
    %v137 = vadd.f32 0.0, %v136
    %v138 = vpop.f32.mrb[0].mxu0
    %139 = vdwg.mxu0
    %v140 = vadd.f32 %v22, %v132
    %v141 = vadd.f32 %v23, %v137
    %vm142 = vcmask 523264
    %143 = vst.msk [vmem:[#allocation2] sm:$0xff] %vm142, %v140
    %144 = vst.msk [vmem:[#allocation2 + $0x8] sm:$0xff] %vm142, %v141
    // Predicated region
    $region18: #{tpu_custom_call.1} parent=1 // pred_check
      %p145 = pneg %p15
    $region19: #{tpu_custom_call.1} parent=1 // pred_check_branch
      %147 = sbr.rel (%p145) target = $region21
    $region20: #{tpu_custom_call.1} parent=1 // pred_region
      %v148 = vld [vmem:[#allocation2] sm:$0xff]
      %v149 = vld [vmem:[#allocation2 + $0x8] sm:$0xff]
      %v150 = vld [vmem:[%s2] sm:$0x1]
      %v152 = vlaneseq
      %v153 = vshrl.u32 %v152, 7
      %v154 = vsub.s32 0, %v153
      %v155 = vrot.slane %v150, %v154
      %v157 = vadd.f32 %v148, %v155
      %v158 = vadd.f32 %v149, %v155
      %159 = vst.msk [vmem:[#allocation3] sm:$0xff] %vm142, %v157
      %160 = vst.msk [vmem:[#allocation3 + $0x8] sm:$0xff] %vm142, %v158
    $region21: #{tpu_custom_call.1} parent=1 // pred_fallthru
      _
    // Predicated region
    $region22: #{tpu_custom_call.1} parent=1 // pred_check
      _
    $region23: #{tpu_custom_call.1} parent=1 // pred_check_branch
      %162 = sbr.rel (0) target = $region25
    $region24: #{tpu_custom_call.1} parent=1 // pred_region
      %s164 = ssub.s32 256, 256
      %165 = vsyncadd [#allocation4], %s164
      %s166 = sshll.u32 [#allocation3], 4
      %s167 = int_to_ptr.vmem [resolvable:$true] %s166
      %172 = dma.vmem_to_hbm [thread:$0]  %s167, 256, %s3, [#allocation4], 128, 128, 8
    $region25: #{tpu_custom_call.1} parent=1 // pred_fallthru
      _
    // Predicated region
    $region26: #{tpu_custom_call.1} parent=1 // pred_check
      _
    $region27: #{tpu_custom_call.1} parent=1 // pred_check_branch
      %174 = sbr.rel (0) target = $region29
    $region28: #{tpu_custom_call.1} parent=1 // pred_region
      %175 = dma.done [#allocation4], 256
    $region29: #{tpu_custom_call.1} parent=1 // pred_fallthru
      _
    %176 = vsyncpa [#allocation4], 1

</llo_original>
